<compile_context>
chip_gen: v7x
topology: tpu7x:2x2x1
jax: 0.10.0
libtpu: 0.0.40
codegen_flags: <defaults>
</compile_context>

<pallas_src>
import functools

import jax
import jax.numpy as jnp
from jax.experimental import pallas as pl
from jax.experimental.pallas import tpu as pltpu

_LANE = 128
_SUBLANE = 8


def _round_up(v, m):
    return (v + m - 1) // m * m


def _pad2d(a, rows, cols):
    r, c = a.shape
    if r == rows and c == cols:
        return a
    return jnp.pad(a, ((0, rows - r), (0, cols - c)))


def _nn_kernel(x_ref, w1_ref, b1_ref, wst_ref, bst_ref, *rest,
               n_out_pad, use_scaler):
    if use_scaler:
        scaler_ref, st_ref = rest
    else:
        (st_ref,) = rest

    # fc1 + ReLU. f32 accumulation; elementwise math stays f32 (v5e has no bf16 VPU/EUP).
    x = x_ref[...].astype(w1_ref.dtype)
    hidden = jnp.dot(x, w1_ref[...], preferred_element_type=jnp.float32)
    hidden = jnp.maximum(hidden + b1_ref[...], 0.0)

    # Fused fc_s | fc_t: a single MXU pass over the (n_hidden, 2*n_out) weight slab.
    st = jnp.dot(hidden.astype(wst_ref.dtype), wst_ref[...],
                 preferred_element_type=jnp.float32)
    st = st + bst_ref[...]

    # tanh (EUP) only on the s half; both halves are lane-aligned (n_out_pad % 128 == 0)
    # so the two stores into the fused output slab are unmasked and lane-dense.
    s = jnp.tanh(st[:, :n_out_pad])
    if use_scaler:
        s = scaler_ref[...] * s
    st_ref[:, :n_out_pad] = s.astype(st_ref.dtype)
    st_ref[:, n_out_pad:] = st[:, n_out_pad:].astype(st_ref.dtype)


@functools.partial(jax.jit, static_argnames=("scale", "compute_dtype", "tile_b"))
def nn_forward(x, w1, b1, ws, bs, wt, bt, scaler=None, *, scale=False,
               compute_dtype=jnp.float32, tile_b=512):
    """_NN forward. Weights are stored pre-transposed as (in, out); biases (1, out).

    Returns (s, t) each of shape (batch, n_out). `scaler` is only used when
    scale=True. `compute_dtype` controls the matmul-input dtype (e.g. bf16 on
    v6e/v7x); accumulation and elementwise math are always f32.
    """
    batch, n_input = x.shape
    n_hidden = w1.shape[1]
    n_out = ws.shape[1]

    # Lane-pad feature dims to 128 so every MXU pass / store is lane-dense.
    n_in_p = _round_up(n_input, _LANE)
    n_h_p = _round_up(n_hidden, _LANE)
    n_out_p = _round_up(n_out, _LANE)

    # Batch tile: multiple of 8 sublanes; big tiles at large batch for pipelining.
    tb = tile_b if batch >= tile_b else _round_up(batch, _SUBLANE)
    batch_p = _round_up(batch, tb)

    x_p = _pad2d(x, batch_p, n_in_p)
    w1_p = _pad2d(w1, n_in_p, n_h_p).astype(compute_dtype)
    b1_p = _pad2d(b1, 1, n_h_p)
    # Fuse the s / t heads into one weight/bias slab.
    wst_p = jnp.concatenate(
        [_pad2d(ws, n_h_p, n_out_p), _pad2d(wt, n_h_p, n_out_p)],
        axis=1).astype(compute_dtype)
    bst_p = jnp.concatenate(
        [_pad2d(bs, 1, n_out_p), _pad2d(bt, 1, n_out_p)], axis=1)

    grid = (batch_p // tb,)
    resident = lambda i: (0, 0)   # weights/biases: same block every step -> VMEM-resident
    tiled = lambda i: (i, 0)      # x / output slab: tiled over the batch axis

    in_specs = [
        pl.BlockSpec((tb, n_in_p), tiled),
        pl.BlockSpec((n_in_p, n_h_p), resident),
        pl.BlockSpec((1, n_h_p), resident),
        pl.BlockSpec((n_h_p, 2 * n_out_p), resident),
        pl.BlockSpec((1, 2 * n_out_p), resident),
    ]
    inputs = [x_p, w1_p, b1_p, wst_p, bst_p]
    if scale:
        in_specs.append(pl.BlockSpec((1, n_out_p), resident))
        inputs.append(_pad2d(scaler, 1, n_out_p))

    w_itemsize = jnp.dtype(compute_dtype).itemsize
    x_itemsize = jnp.dtype(x.dtype).itemsize
    cost = pl.CostEstimate(
        flops=2 * batch_p * (n_in_p * n_h_p + n_h_p * 2 * n_out_p),
        transcendentals=batch_p * n_out_p,
        bytes_accessed=(batch_p * n_in_p * x_itemsize
                        + (n_in_p * n_h_p + n_h_p * 2 * n_out_p) * w_itemsize
                        + 2 * batch_p * n_out_p * x_itemsize),
    )

    kernel = functools.partial(_nn_kernel, n_out_pad=n_out_p, use_scaler=scale)
    st_p = pl.pallas_call(
        kernel,
        out_shape=jax.ShapeDtypeStruct((batch_p, 2 * n_out_p), x.dtype),
        grid=grid,
        in_specs=in_specs,
        out_specs=pl.BlockSpec((tb, 2 * n_out_p), tiled),
        compiler_params=pltpu.CompilerParams(
            # Batch tiles are independent -> shard across v7x's 2 TensorCores.
            dimension_semantics=("parallel",),
            # Sized for v7x's 64 MiB physical VMEM (tiles are far smaller).
            vmem_limit_bytes=48 * 1024 * 1024,
        ),
        cost_estimate=cost,
    )(*inputs)

    s = st_p[:batch, :n_out]
    t = st_p[:batch, n_out_p:n_out_p + n_out]
    return s, t


def init_params(key, n_input, n_hidden, n_out, dtype=jnp.float32):
    """Deterministic parameter init (mimics randomize_weights(): N(0, 1/fan_in))."""
    k1, k2, k3, k4, k5, k6 = jax.random.split(key, 6)
    w1 = jax.random.normal(k1, (n_input, n_hidden), dtype) / n_input
    b1 = jax.random.normal(k2, (1, n_hidden), dtype) * 0.1
    ws = jax.random.normal(k3, (n_hidden, n_out), dtype) / n_hidden
    bs = jax.random.normal(k4, (1, n_out), dtype) * 0.1
    wt = jax.random.normal(k5, (n_hidden, n_out), dtype) / n_hidden
    bt = jax.random.normal(k6, (1, n_out), dtype) * 0.1
    scaler = jnp.ones((1, n_out), dtype)  # nn.init.constant_(self.scaler, 1.0)
    return w1, b1, ws, bs, wt, bt, scaler


def reference_forward(x, w1, b1, ws, bs, wt, bt, scaler=None, *, scale=False):
    hidden = jax.nn.relu(x @ w1 + b1)
    s = jnp.tanh(hidden @ ws + bs)
    if scale:
        s = scaler * s
    t = hidden @ wt + bt
    return s, t


if __name__ == "__main__":
    # Small shapes consistent with the module: x is (batch, n_input).
    batch, n_input, n_hidden, n_out = 8, 16, 32, 16
    key = jax.random.PRNGKey(0)
    kx, kp = jax.random.split(key)

    x = jax.random.normal(kx, (batch, n_input), jnp.float32)
    w1, b1, ws, bs, wt, bt, scaler = init_params(kp, n_input, n_hidden, n_out)

    # scale=True path (f32 matmuls).
    s, t = nn_forward(x, w1, b1, ws, bs, wt, bt, scaler, scale=True)
    jax.block_until_ready((s, t))
    s_ref, t_ref = reference_forward(x, w1, b1, ws, bs, wt, bt, scaler, scale=True)
    assert jnp.allclose(s, s_ref, atol=1e-5, rtol=1e-5)
    assert jnp.allclose(t, t_ref, atol=1e-5, rtol=1e-5)

    # scale=False path (no scaler input, no extra multiply in the kernel).
    s2, t2 = nn_forward(x, w1, b1, ws, bs, wt, bt, None, scale=False)
    jax.block_until_ready((s2, t2))
    s2_ref, t2_ref = reference_forward(x, w1, b1, ws, bs, wt, bt, scale=False)
    assert jnp.allclose(s2, s2_ref, atol=1e-5, rtol=1e-5)
    assert jnp.allclose(t2, t2_ref, atol=1e-5, rtol=1e-5)

    # bf16 matmul inputs (f32 accumulation + f32 elementwise) for v6e/v7x MXU throughput.
    s3, t3 = nn_forward(x, w1, b1, ws, bs, wt, bt, scaler, scale=True,
                        compute_dtype=jnp.bfloat16)
    jax.block_until_ready((s3, t3))
    assert jnp.allclose(s3, s_ref, atol=3e-2, rtol=3e-2)
    assert jnp.allclose(t3, t_ref, atol=3e-2, rtol=3e-2)

    # Larger-batch sanity check to exercise the multi-tile grid path.
    xb = jax.random.normal(kx, (1030, n_input), jnp.float32)
    sb, tb_ = nn_forward(xb, w1, b1, ws, bs, wt, bt, scaler, scale=True)
    jax.block_until_ready((sb, tb_))
    sb_ref, tb_ref = reference_forward(xb, w1, b1, ws, bs, wt, bt, scaler, scale=True)
    assert jnp.allclose(sb, sb_ref, atol=1e-5, rtol=1e-5)
    assert jnp.allclose(tb_, tb_ref, atol=1e-5, rtol=1e-5)

    print("KERNEL_OK")
</pallas_src>

<mosaic_0001>
module attributes {stable_mosaic.version = 11 : i64} {
  func.func @_nn_kernel(%arg0: i32, %arg1: memref<8x128xf32, #tpu.memory_space<vmem>>, %arg2: memref<128x128xf32, #tpu.memory_space<vmem>>, %arg3: memref<1x128xf32, #tpu.memory_space<vmem>>, %arg4: memref<128x256xf32, #tpu.memory_space<vmem>>, %arg5: memref<1x256xf32, #tpu.memory_space<vmem>>, %arg6: memref<1x128xf32, #tpu.memory_space<vmem>>, %arg7: memref<8x256xf32, #tpu.memory_space<vmem>>) attributes {dimension_semantics = [#tpu.dimension_semantics<parallel>], iteration_bounds = array<i64: 1>, scalar_prefetch = 0 : i64, scratch_operands = 0 : i64, tpu.core_type = #tpu.core_type<tc>, window_params = [{transform_indices = @transform_0, window_bounds = array<i64: 8, 128>}, {pipeline_mode = #tpu.pipeline_mode<synchronous>, transform_indices = @transform_1, window_bounds = array<i64: 128, 128>}, {pipeline_mode = #tpu.pipeline_mode<synchronous>, transform_indices = @transform_2, window_bounds = array<i64: 1, 128>}, {pipeline_mode = #tpu.pipeline_mode<synchronous>, transform_indices = @transform_3, window_bounds = array<i64: 128, 256>}, {pipeline_mode = #tpu.pipeline_mode<synchronous>, transform_indices = @transform_4, window_bounds = array<i64: 1, 256>}, {pipeline_mode = #tpu.pipeline_mode<synchronous>, transform_indices = @transform_5, window_bounds = array<i64: 1, 128>}, {transform_indices = @transform_6, window_bounds = array<i64: 8, 256>}]} {
    %c0 = arith.constant 0 : index
    %c0_0 = arith.constant 0 : index
    %0 = vector.load %arg1[%c0, %c0_0] : memref<8x128xf32, #tpu.memory_space<vmem>>, vector<8x128xf32>
    %c0_1 = arith.constant 0 : index
    %c0_2 = arith.constant 0 : index
    %1 = vector.load %arg2[%c0_1, %c0_2] : memref<128x128xf32, #tpu.memory_space<vmem>>, vector<128x128xf32>
    %cst = arith.constant dense<0.000000e+00> : vector<8x128xf32>
    %2 = tpu.matmul %0, %1, %cst {dimension_numbers = #tpu.dot_dimension_numbers<[1], [0], [0], [1], [0, 0, 1, 1], [], []>} : vector<8x128xf32>, vector<128x128xf32>, vector<8x128xf32> -> vector<8x128xf32>
    %c0_3 = arith.constant 0 : index
    %c0_4 = arith.constant 0 : index
    %3 = vector.load %arg3[%c0_3, %c0_4] : memref<1x128xf32, #tpu.memory_space<vmem>>, vector<1x128xf32>
    %4 = vector.broadcast %3 : vector<1x128xf32> to vector<8x128xf32>
    %5 = arith.addf %2, %4 : vector<8x128xf32>
    %cst_5 = arith.constant 0.000000e+00 : f32
    %6 = vector.broadcast %cst_5 : f32 to vector<8x128xf32>
    %7 = arith.maximumf %5, %6 : vector<8x128xf32>
    %c0_6 = arith.constant 0 : index
    %c0_7 = arith.constant 0 : index
    %8 = vector.load %arg4[%c0_6, %c0_7] : memref<128x256xf32, #tpu.memory_space<vmem>>, vector<128x256xf32>
    %cst_8 = arith.constant dense<0.000000e+00> : vector<8x256xf32>
    %9 = tpu.matmul %7, %8, %cst_8 {dimension_numbers = #tpu.dot_dimension_numbers<[1], [0], [0], [1], [0, 0, 1, 1], [], []>} : vector<8x128xf32>, vector<128x256xf32>, vector<8x256xf32> -> vector<8x256xf32>
    %c0_9 = arith.constant 0 : index
    %c0_10 = arith.constant 0 : index
    %10 = vector.load %arg5[%c0_9, %c0_10] : memref<1x256xf32, #tpu.memory_space<vmem>>, vector<1x256xf32>
    %11 = vector.broadcast %10 : vector<1x256xf32> to vector<8x256xf32>
    %12 = arith.addf %9, %11 : vector<8x256xf32>
    %13 = vector.extract_strided_slice %12 {offsets = [0, 0], sizes = [8, 128], strides = [1, 1]} : vector<8x256xf32> to vector<8x128xf32>
    %14 = math.tanh %13 : vector<8x128xf32>
    %c0_11 = arith.constant 0 : index
    %c0_12 = arith.constant 0 : index
    %15 = vector.load %arg6[%c0_11, %c0_12] : memref<1x128xf32, #tpu.memory_space<vmem>>, vector<1x128xf32>
    %16 = vector.broadcast %15 : vector<1x128xf32> to vector<8x128xf32>
    %17 = arith.mulf %16, %14 : vector<8x128xf32>
    %c0_13 = arith.constant 0 : index
    %c0_14 = arith.constant 0 : index
    %18 = vector.load %arg7[%c0_13, %c0_14] : memref<8x256xf32, #tpu.memory_space<vmem>>, vector<8x128xf32>
    tpu.vector_store %arg7[%c0_13, %c0_14], %17 {strides = array<i32>} : memref<8x256xf32, #tpu.memory_space<vmem>>, vector<8x128xf32>,
    %19 = vector.extract_strided_slice %12 {offsets = [0, 128], sizes = [8, 128], strides = [1, 1]} : vector<8x256xf32> to vector<8x128xf32>
    %c0_15 = arith.constant 0 : index
    %c128 = arith.constant 128 : index
    %20 = vector.load %arg7[%c0_15, %c128] : memref<8x256xf32, #tpu.memory_space<vmem>>, vector<8x128xf32>
    tpu.vector_store %arg7[%c0_15, %c128], %19 {strides = array<i32>} : memref<8x256xf32, #tpu.memory_space<vmem>>, vector<8x128xf32>,
    return
  }
  func.func @transform_0(%arg0: i32) -> (i32, i32) {
    %c0_i32 = arith.constant 0 : i32
    %c0_i32_0 = arith.constant 0 : i32
    return %arg0, %c0_i32 : i32, i32
  }
  func.func @transform_1(%arg0: i32) -> (i32, i32) {
    %c0_i32 = arith.constant 0 : i32
    %c0_i32_0 = arith.constant 0 : i32
    %c0_i32_1 = arith.constant 0 : i32
    return %c0_i32, %c0_i32_0 : i32, i32
  }
  func.func @transform_2(%arg0: i32) -> (i32, i32) {
    %c0_i32 = arith.constant 0 : i32
    %c0_i32_0 = arith.constant 0 : i32
    %c0_i32_1 = arith.constant 0 : i32
    return %c0_i32, %c0_i32_0 : i32, i32
  }
  func.func @transform_3(%arg0: i32) -> (i32, i32) {
    %c0_i32 = arith.constant 0 : i32
    %c0_i32_0 = arith.constant 0 : i32
    %c0_i32_1 = arith.constant 0 : i32
    return %c0_i32, %c0_i32_0 : i32, i32
  }
  func.func @transform_4(%arg0: i32) -> (i32, i32) {
    %c0_i32 = arith.constant 0 : i32
    %c0_i32_0 = arith.constant 0 : i32
    %c0_i32_1 = arith.constant 0 : i32
    return %c0_i32, %c0_i32_0 : i32, i32
  }
  func.func @transform_5(%arg0: i32) -> (i32, i32) {
    %c0_i32 = arith.constant 0 : i32
    %c0_i32_0 = arith.constant 0 : i32
    %c0_i32_1 = arith.constant 0 : i32
    return %c0_i32, %c0_i32_0 : i32, i32
  }
  func.func @transform_6(%arg0: i32) -> (i32, i32) {
    %c0_i32 = arith.constant 0 : i32
    %c0_i32_0 = arith.constant 0 : i32
    return %arg0, %c0_i32 : i32, i32
  }
}

</mosaic_0001>

<llo_original>
// kernel: nn_forward.1
$region0: #{nn_forward.1}
  #allocation0 [shape = 'u32[]', space=smem, size = 0x4, offset = 0x4, fixed_abs, tag = 'smem constant byte address 0x4 - core index']
  #allocation1 [shape = 'u32[144,128]{1,0:T(1,128)}', space=vmem, size = 0x12000, scoped, tag = 'internal scratch']
  %s0 = inlined_call_operand.vmem [shape: f32[8,128], index: 0, kind: input, shape index: {}]
  %s1 = inlined_call_operand.vmem [shape: f32[128,128], index: 1, kind: input, shape index: {}]
  %s2 = inlined_call_operand.vmem [shape: f32[1,128], index: 2, kind: input, shape index: {}]
  %s3 = inlined_call_operand.vmem [shape: f32[128,256], index: 3, kind: input, shape index: {}]
  %s4 = inlined_call_operand.vmem [shape: f32[1,256], index: 4, kind: input, shape index: {}]
  %s5 = inlined_call_operand.vmem [shape: f32[1,128], index: 5, kind: input, shape index: {}]
  %s6 = inlined_call_operand.vmem [shape: f32[8,256], index: 6, kind: output, shape index: {}]
  %s7 = sld [smem:[#allocation0]]
  $region34: #{nn_forward.1} parent=0
    _
  %s9 = ssub.s32 1, %s7
  %s10 = scalar_select 0, %s9, %s7
  // Predicated region
  $region2: #{nn_forward.1} parent=0 // pred_check
    _
  $region3: #{nn_forward.1} parent=0 // pred_check_branch
    %12 = sbr.rel (0) target = $region5
  $region4: #{nn_forward.1} parent=0 // pred_region
    _
  $region5: #{nn_forward.1} parent=0 // pred_fallthru
    _
  // Predicated region
  $region6: #{nn_forward.1} parent=0 // pred_check
    _
  $region7: #{nn_forward.1} parent=0 // pred_check_branch
    %14 = sbr.rel (0) target = $region9
  $region8: #{nn_forward.1} parent=0 // pred_region
    _
  $region9: #{nn_forward.1} parent=0 // pred_fallthru
    _
  // Predicated region
  $region10: #{nn_forward.1} parent=0 // pred_check
    _
  $region11: #{nn_forward.1} parent=0 // pred_check_branch
    %16 = sbr.rel (0) target = $region13
  $region12: #{nn_forward.1} parent=0 // pred_region
    _
  $region13: #{nn_forward.1} parent=0 // pred_fallthru
    _
  // Predicated region
  $region14: #{nn_forward.1} parent=0 // pred_check
    _
  $region15: #{nn_forward.1} parent=0 // pred_check_branch
    %18 = sbr.rel (0) target = $region17
  $region16: #{nn_forward.1} parent=0 // pred_region
    _
  $region17: #{nn_forward.1} parent=0 // pred_fallthru
    _
  // Predicated region
  $region18: #{nn_forward.1} parent=0 // pred_check
    _
  $region19: #{nn_forward.1} parent=0 // pred_check_branch
    %20 = sbr.rel (0) target = $region21
  $region20: #{nn_forward.1} parent=0 // pred_region
    _
  $region21: #{nn_forward.1} parent=0 // pred_fallthru
    _
  // Predicated region
  $region22: #{nn_forward.1} parent=0 // pred_check
    _
  $region23: #{nn_forward.1} parent=0 // pred_check_branch
    %22 = sbr.rel (0) target = $region25
  $region24: #{nn_forward.1} parent=0 // pred_region
    _
  $region25: #{nn_forward.1} parent=0 // pred_fallthru
    _
  %v23 = vld [vmem:[%s0] sm:$0xff]
  %v24 = vld [vmem:[%s1] sm:$0xff]
  %v25 = vld [vmem:[%s1 + $0x8] sm:$0xff]
  %v26 = vld [vmem:[%s1 + $0x10] sm:$0xff]
  %v27 = vld [vmem:[%s1 + $0x18] sm:$0xff]
  %v28 = vld [vmem:[%s1 + $0x20] sm:$0xff]
  %v29 = vld [vmem:[%s1 + $0x28] sm:$0xff]
  %v30 = vld [vmem:[%s1 + $0x30] sm:$0xff]
  %v31 = vld [vmem:[%s1 + $0x38] sm:$0xff]
  %v32 = vld [vmem:[%s1 + $0x40] sm:$0xff]
  %v33 = vld [vmem:[%s1 + $0x48] sm:$0xff]
  %v34 = vld [vmem:[%s1 + $0x50] sm:$0xff]
  %v35 = vld [vmem:[%s1 + $0x58] sm:$0xff]
  %v36 = vld [vmem:[%s1 + $0x60] sm:$0xff]
  %v37 = vld [vmem:[%s1 + $0x68] sm:$0xff]
  %v38 = vld [vmem:[%s1 + $0x70] sm:$0xff]
  %v39 = vld [vmem:[%s1 + $0x78] sm:$0xff]
  %v40 = vld [vmem:[%s2] sm:$0x1]
  %v42 = vlaneseq
  %v43 = vshrl.u32 %v42, 7
  %v44 = vsub.s32 0, %v43
  %v45 = vrot.slane %v40, %v44
  %47 = vmatprep.subr.mxu0 0.0
  %48 = vmatpush1.msra.mxu0 %v24
  %49 = vmatprep.subr.mxu0 0.0
  %50 = vmatpush1.msra.mxu0 %v25
  %51 = vmatprep.subr.mxu0 0.0
  %52 = vmatpush1.msra.mxu0 %v26
  %53 = vmatprep.subr.mxu0 0.0
  %54 = vmatpush1.msra.mxu0 %v27
  %55 = vmatprep.subr.mxu0 0.0
  %56 = vmatpush1.msra.mxu0 %v28
  %57 = vmatprep.subr.mxu0 0.0
  %58 = vmatpush1.msra.mxu0 %v29
  %59 = vmatprep.subr.mxu0 0.0
  %60 = vmatpush1.msra.mxu0 %v30
  %61 = vmatprep.subr.mxu0 0.0
  %62 = vmatpush1.msra.mxu0 %v31
  %63 = vmatprep.subr.mxu0 0.0
  %64 = vmatpush1.msra.mxu0 %v32
  %65 = vmatprep.subr.mxu0 0.0
  %66 = vmatpush1.msra.mxu0 %v33
  %67 = vmatprep.subr.mxu0 0.0
  %68 = vmatpush1.msra.mxu0 %v34
  %69 = vmatprep.subr.mxu0 0.0
  %70 = vmatpush1.msra.mxu0 %v35
  %71 = vmatprep.subr.mxu0 0.0
  %72 = vmatpush1.msra.mxu0 %v36
  %73 = vmatprep.subr.mxu0 0.0
  %74 = vmatpush1.msra.mxu0 %v37
  %75 = vmatprep.subr.mxu0 0.0
  %76 = vmatpush1.msra.mxu0 %v38
  %77 = vmatprep.subr.mxu0 0.0
  %78 = vmatpush1.msra.mxu0 %v39
  %79 = vmatprep.subr.mxu0 0.0
  %80 = vmatpush1.msra.mxu0 0.0
  %81 = vmatprep.subr.mxu0 0.0
  %82 = vmatpush1.msra.mxu0 0.0
  %83 = vmatprep.subr.mxu0 0.0
  %84 = vmatpush1.msra.mxu0 0.0
  %85 = vmatprep.subr.mxu0 0.0
  %86 = vmatpush1.msra.mxu0 0.0
  %87 = vmatprep.subr.mxu0 0.0
  %88 = vmatpush1.msra.mxu0 0.0
  %89 = vmatprep.subr.mxu0 0.0
  %90 = vmatpush1.msra.mxu0 0.0
  %91 = vmatprep.subr.mxu0 0.0
  %92 = vmatpush1.msra.mxu0 0.0
  %93 = vmatprep.subr.mxu0 0.0
  %94 = vmatpush1.msra.mxu0 0.0
  %95 = vmatprep.subr.mxu0 0.0
  %96 = vmatpush1.msra.mxu0 0.0
  %97 = vmatprep.subr.mxu0 0.0
  %98 = vmatpush1.msra.mxu0 0.0
  %99 = vmatprep.subr.mxu0 0.0
  %100 = vmatpush1.msra.mxu0 0.0
  %101 = vmatprep.subr.mxu0 0.0
  %102 = vmatpush1.msra.mxu0 0.0
  %103 = vmatprep.subr.mxu0 0.0
  %104 = vmatpush1.msra.mxu0 0.0
  %105 = vmatprep.subr.mxu0 0.0
  %106 = vmatpush1.msra.mxu0 0.0
  %107 = vmatprep.subr.mxu0 0.0
  %108 = vmatpush1.msra.mxu0 0.0
  %109 = vmatprep.subr.mxu0 0.0
  %110 = vmatpush1.msra.mxu0 0.0
  %111 = vmatprep.mubr.f32.mxu0 0.0
  %112 = vmatmul.mubr.f32.gmra.mrb[0].mxu0 %v23
  %v113 = vpop.f32.mrb[0].mxu0
  %v114 = vadd.f32 %v45, %v113
  %v115 = vpop.f32.mrb[0].mxu0
  %116 = vdwg.mxu0
  %v117 = vmax.f32 %v114, 0.0
  %v118 = vld [vmem:[%s3] sm:$0xff]
  %v119 = vld [vmem:[%s3 + $0x8] sm:$0xff]
  %v120 = vld [vmem:[%s3 + $0x10] sm:$0xff]
  %v121 = vld [vmem:[%s3 + $0x18] sm:$0xff]
  %v122 = vld [vmem:[%s3 + $0x20] sm:$0xff]
  %v123 = vld [vmem:[%s3 + $0x28] sm:$0xff]
  %v124 = vld [vmem:[%s3 + $0x30] sm:$0xff]
  %v125 = vld [vmem:[%s3 + $0x38] sm:$0xff]
  %v126 = vld [vmem:[%s3 + $0x40] sm:$0xff]
  %v127 = vld [vmem:[%s3 + $0x48] sm:$0xff]
  %v128 = vld [vmem:[%s3 + $0x50] sm:$0xff]
  %v129 = vld [vmem:[%s3 + $0x58] sm:$0xff]
  %v130 = vld [vmem:[%s3 + $0x60] sm:$0xff]
  %v131 = vld [vmem:[%s3 + $0x68] sm:$0xff]
  %v132 = vld [vmem:[%s3 + $0x70] sm:$0xff]
  %v133 = vld [vmem:[%s3 + $0x78] sm:$0xff]
  %v134 = vld [vmem:[%s3 + $0x80] sm:$0xff]
  %v135 = vld [vmem:[%s3 + $0x88] sm:$0xff]
  %v136 = vld [vmem:[%s3 + $0x90] sm:$0xff]
  %v137 = vld [vmem:[%s3 + $0x98] sm:$0xff]
  %v138 = vld [vmem:[%s3 + $0xa0] sm:$0xff]
  %v139 = vld [vmem:[%s3 + $0xa8] sm:$0xff]
  %v140 = vld [vmem:[%s3 + $0xb0] sm:$0xff]
  %v141 = vld [vmem:[%s3 + $0xb8] sm:$0xff]
  %v142 = vld [vmem:[%s3 + $0xc0] sm:$0xff]
  %v143 = vld [vmem:[%s3 + $0xc8] sm:$0xff]
  %v144 = vld [vmem:[%s3 + $0xd0] sm:$0xff]
  %v145 = vld [vmem:[%s3 + $0xd8] sm:$0xff]
  %v146 = vld [vmem:[%s3 + $0xe0] sm:$0xff]
  %v147 = vld [vmem:[%s3 + $0xe8] sm:$0xff]
  %v148 = vld [vmem:[%s3 + $0xf0] sm:$0xff]
  %v149 = vld [vmem:[%s3 + $0xf8] sm:$0xff]
  %v150 = vld [vmem:[%s4] sm:$0x3]
  %v152 = vlaneseq
  %v153 = vshrl.u32 %v152, 7
  %v154 = vsub.s32 0, %v153
  %v155 = vrot.slane %v150, %v154
  %v156 = vlaneseq
  %v157 = vshrl.u32 %v156, 7
  %v158 = vsub.s32 1, %v157
  %v159 = vrot.slane %v150, %v158
  %162 = vmatprep.subr.mxu0 %v119
  %163 = vmatpush1.msra.mxu0 %v118
  %164 = vmatprep.subr.mxu0 %v121
  %165 = vmatpush1.msra.mxu0 %v120
  %166 = vmatprep.subr.mxu0 %v123
  %167 = vmatpush1.msra.mxu0 %v122
  %168 = vmatprep.subr.mxu0 %v125
  %169 = vmatpush1.msra.mxu0 %v124
  %170 = vmatprep.subr.mxu0 %v127
  %171 = vmatpush1.msra.mxu0 %v126
  %172 = vmatprep.subr.mxu0 %v129
  %173 = vmatpush1.msra.mxu0 %v128
  %174 = vmatprep.subr.mxu0 %v131
  %175 = vmatpush1.msra.mxu0 %v130
  %176 = vmatprep.subr.mxu0 %v133
  %177 = vmatpush1.msra.mxu0 %v132
  %178 = vmatprep.subr.mxu0 %v135
  %179 = vmatpush1.msra.mxu0 %v134
  %180 = vmatprep.subr.mxu0 %v137
  %181 = vmatpush1.msra.mxu0 %v136
  %182 = vmatprep.subr.mxu0 %v139
  %183 = vmatpush1.msra.mxu0 %v138
  %184 = vmatprep.subr.mxu0 %v141
  %185 = vmatpush1.msra.mxu0 %v140
  %186 = vmatprep.subr.mxu0 %v143
  %187 = vmatpush1.msra.mxu0 %v142
  %188 = vmatprep.subr.mxu0 %v145
  %189 = vmatpush1.msra.mxu0 %v144
  %190 = vmatprep.subr.mxu0 %v147
  %191 = vmatpush1.msra.mxu0 %v146
  %192 = vmatprep.subr.mxu0 %v149
  %193 = vmatpush1.msra.mxu0 %v148
  %194 = vmatprep.subr.mxu0 0.0
  %195 = vmatpush1.msra.mxu0 0.0
  %196 = vmatprep.subr.mxu0 0.0
  %197 = vmatpush1.msra.mxu0 0.0
  %198 = vmatprep.subr.mxu0 0.0
  %199 = vmatpush1.msra.mxu0 0.0
  %200 = vmatprep.subr.mxu0 0.0
  %201 = vmatpush1.msra.mxu0 0.0
  %202 = vmatprep.subr.mxu0 0.0
  %203 = vmatpush1.msra.mxu0 0.0
  %204 = vmatprep.subr.mxu0 0.0
  %205 = vmatpush1.msra.mxu0 0.0
  %206 = vmatprep.subr.mxu0 0.0
  %207 = vmatpush1.msra.mxu0 0.0
  %208 = vmatprep.subr.mxu0 0.0
  %209 = vmatpush1.msra.mxu0 0.0
  %210 = vmatprep.subr.mxu0 0.0
  %211 = vmatpush1.msra.mxu0 0.0
  %212 = vmatprep.subr.mxu0 0.0
  %213 = vmatpush1.msra.mxu0 0.0
  %214 = vmatprep.subr.mxu0 0.0
  %215 = vmatpush1.msra.mxu0 0.0
  %216 = vmatprep.subr.mxu0 0.0
  %217 = vmatpush1.msra.mxu0 0.0
  %218 = vmatprep.subr.mxu0 0.0
  %219 = vmatpush1.msra.mxu0 0.0
  %220 = vmatprep.subr.mxu0 0.0
  %221 = vmatpush1.msra.mxu0 0.0
  %222 = vmatprep.subr.mxu0 0.0
  %223 = vmatpush1.msra.mxu0 0.0
  %224 = vmatprep.subr.mxu0 0.0
  %225 = vmatpush1.msra.mxu0 0.0
  %226 = vmatprep.mubr.f32.mxu0 0.0
  %227 = vmatmul.mubr.f32.gmra.mrb[0].mxu0 %v117
  %v228 = vpop.f32.mrb[0].mxu0
  %v229 = vadd.f32 %v155, %v228
  %v230 = vpop.f32.mrb[0].mxu0
  %v231 = vadd.f32 %v159, %v230
  %232 = vdwg.mxu0
  %v233 = vtanh.pop %v229
  %v234 = vld [vmem:[%s5] sm:$0x1]
  %v236 = vlaneseq
  %v237 = vshrl.u32 %v236, 7
  %v238 = vsub.s32 0, %v237
  %v239 = vrot.slane %v234, %v238
  %v241 = vmul.f32 %v239, %v233
  %242 = vst [vmem:[%s6] sm:$0xff] %v241
  %243 = vst [vmem:[%s6 + $0x8] sm:$0xff] %v231
  // Predicated region
  $region26: #{nn_forward.1} parent=0 // pred_check
    _
  $region27: #{nn_forward.1} parent=0 // pred_check_branch
    %245 = sbr.rel (0) target = $region29
  $region28: #{nn_forward.1} parent=0 // pred_region
    _
  $region29: #{nn_forward.1} parent=0 // pred_fallthru
    _
  // Predicated region
  $region30: #{nn_forward.1} parent=0 // pred_check
    _
  $region31: #{nn_forward.1} parent=0 // pred_check_branch
    %247 = sbr.rel (0) target = $region33
  $region32: #{nn_forward.1} parent=0 // pred_region
    _
  $region33: #{nn_forward.1} parent=0 // pred_fallthru
    _

</llo_original>
